<compile_context>
chip_gen: v7x
topology: tpu7x:2x2x1
jax: 0.10.0
libtpu: 0.0.40
codegen_flags: <defaults>
</compile_context>

<pallas_src>
import functools

import jax
import jax.numpy as jnp
from jax.experimental import pallas as pl
from jax.experimental.pallas import tpu as pltpu


def _round_up(n, m):
    return ((n + m - 1) // m) * m


def _bn_relu(z, gamma, beta, eps):
    # BatchNorm1d training mode: batch mean, biased batch variance (per feature), f32.
    mean = jnp.mean(z, axis=0, keepdims=True)
    centered = z - mean
    var = jnp.mean(centered * centered, axis=0, keepdims=True)
    y = centered * jax.lax.rsqrt(var + eps) * gamma + beta
    return jnp.maximum(y, 0.0)  # ReLU


# ---------------------------------------------------------------------------
# Fused whole-network kernel (small nets: everything fits in VMEM, one launch).
# ---------------------------------------------------------------------------
def fcnet_fused_kernel(scales_ref, x_ref, *refs, num_layers, eps):
    """Whole FCNet forward in a single grid step.

    refs = [v_t_0, gamma_0, beta_0, ..., v_t_{L-1}, gamma_{L-1}, beta_{L-1}, o_ref]
    scales_ref: SMEM f32[L], per-layer weight_norm scale g / ||V||_F.
    """
    o_ref = refs[-1]
    h = x_ref[...]                          # (B, D0p), matmul dtype (bf16)
    y = None
    for l in range(num_layers):
        v_t = refs[3 * l][...]              # (Dl_p, Dl1_p), matmul dtype, pre-transposed
        gamma = refs[3 * l + 1][...]        # (1, Dl1_p) f32
        beta = refs[3 * l + 2][...]         # (1, Dl1_p) f32
        s = scales_ref[l]                   # scalar f32 from SMEM
        # weight_norm(Linear, dim=None): s * (h @ V^T).  Bias omitted: a per-feature
        # constant is exactly cancelled by the BatchNorm mean subtraction below.
        z = jnp.dot(h, v_t, preferred_element_type=jnp.float32) * s
        y = _bn_relu(z, gamma, beta, eps)
        # TODO(synk): nn.Dropout is stochastic (torch RNG) -- treated as identity here.
        if l + 1 < num_layers:
            h = y.astype(h.dtype)           # back to matmul dtype for the next MXU pass
    o_ref[...] = y


def fcnet_forward_fused(x, params, *, eps=1e-5, matmul_dtype=jnp.bfloat16):
    """Run the whole FCNet forward as ONE pallas_call (intermediates stay on-chip)."""
    B, d0 = x.shape
    dims = [d0] + [v.shape[0] for (v, _, _, _, _) in params]
    pdims = [_round_up(d, 128) for d in dims]   # lane-dense, MXU-aligned feature dims
    L = len(params)

    x_p = jnp.zeros((B, pdims[0]), matmul_dtype).at[:, :d0].set(x.astype(matmul_dtype))

    # weight_norm(dim=None) scale, computed once in f32 (read-only reduction over V);
    # the effective weight W_eff = s * V is never materialized in HBM.
    scales = jnp.stack([
        (g / jnp.sqrt(jnp.sum(v.astype(jnp.float32) ** 2))).astype(jnp.float32)
        for (v, g, _, _, _) in params
    ])

    inputs = [scales, x_p]
    in_specs = [
        pl.BlockSpec(memory_space=pltpu.MemorySpace.SMEM),     # per-layer scales
        pl.BlockSpec((B, pdims[0]), lambda i: (0, 0)),
    ]
    for l, (v, _, _, gamma, beta) in enumerate(params):
        dout, din = v.shape
        din_p, dout_p = pdims[l], pdims[l + 1]
        # Pre-transposed, zero-padded weight (Din_p, Dout_p): zero rows/cols keep the
        # padded features exactly inert.
        v_t = jnp.zeros((din_p, dout_p), matmul_dtype).at[:din, :dout].set(
            v.T.astype(matmul_dtype))
        gamma_p = jnp.zeros((1, dout_p), jnp.float32).at[0, :dout].set(
            gamma.astype(jnp.float32))
        beta_p = jnp.zeros((1, dout_p), jnp.float32).at[0, :dout].set(
            beta.astype(jnp.float32))
        inputs += [v_t, gamma_p, beta_p]
        in_specs += [
            pl.BlockSpec((din_p, dout_p), lambda i: (0, 0)),
            pl.BlockSpec((1, dout_p), lambda i: (0, 0)),
            pl.BlockSpec((1, dout_p), lambda i: (0, 0)),
        ]

    kernel = functools.partial(fcnet_fused_kernel, num_layers=L, eps=eps)
    out_p = pl.pallas_call(
        kernel,
        out_shape=jax.ShapeDtypeStruct((B, pdims[-1]), jnp.float32),
        grid=(1,),
        in_specs=in_specs,
        out_specs=pl.BlockSpec((B, pdims[-1]), lambda i: (0, 0)),
        compiler_params=pltpu.CompilerParams(dimension_semantics=("arbitrary",)),
    )(*inputs)
    return out_p[:, :dims[-1]]


# ---------------------------------------------------------------------------
# Tiled per-layer kernel (for non-toy layer sizes): grid over (Dout tiles, Din tiles)
# with an f32 VMEM accumulator.  Batch is never tiled -> exact BN batch statistics.
# ---------------------------------------------------------------------------
def fc_layer_tiled_kernel(scale_ref, x_ref, wt_ref, gamma_ref, beta_ref, o_ref,
                          acc_ref, *, eps):
    k = pl.program_id(1)

    @pl.when(k == 0)
    def _():
        acc_ref[...] = jnp.zeros_like(acc_ref)

    acc_ref[...] += jnp.dot(x_ref[...], wt_ref[...],
                            preferred_element_type=jnp.float32)

    @pl.when(k == pl.num_programs(1) - 1)
    def _():
        z = acc_ref[...] * scale_ref[0]     # weight_norm scale; bias cancelled by BN
        o_ref[...] = _bn_relu(z, gamma_ref[...], beta_ref[...], eps)


def fc_layer_tiled(x, v, g, gamma, beta, *, eps=1e-5, matmul_dtype=jnp.bfloat16,
                   tile_n=128, tile_k=128, vmem_limit_bytes=None):
    """One weight_norm(Linear) -> BN -> ReLU layer, tiled over (Dout, Din).

    tile_n / tile_k must be multiples of 128 (v5e MXU geometry); on v6e/v7x 256-aligned
    tiles better feed the 256x256 MXU.  On v7x (64 MiB VMEM) keep resident +
    double-buffered tiles within budget, e.g. via vmem_limit_bytes.
    """
    B, din = x.shape
    dout = v.shape[0]
    din_p = _round_up(din, tile_k)
    dout_p = _round_up(dout, tile_n)

    x_p = jnp.zeros((B, din_p), matmul_dtype).at[:, :din].set(x.astype(matmul_dtype))
    v_t = jnp.zeros((din_p, dout_p), matmul_dtype).at[:din, :dout].set(
        v.T.astype(matmul_dtype))
    gamma_p = jnp.zeros((1, dout_p), jnp.float32).at[0, :dout].set(
        gamma.astype(jnp.float32))
    beta_p = jnp.zeros((1, dout_p), jnp.float32).at[0, :dout].set(
        beta.astype(jnp.float32))
    scale = (g / jnp.sqrt(jnp.sum(v.astype(jnp.float32) ** 2))
             ).astype(jnp.float32).reshape((1,))

    grid = (dout_p // tile_n, din_p // tile_k)
    kernel = functools.partial(fc_layer_tiled_kernel, eps=eps)
    out_p = pl.pallas_call(
        kernel,
        out_shape=jax.ShapeDtypeStruct((B, dout_p), jnp.float32),
        grid=grid,
        in_specs=[
            pl.BlockSpec(memory_space=pltpu.MemorySpace.SMEM),      # weight_norm scale
            pl.BlockSpec((B, tile_k), lambda j, k: (0, k)),         # x: same for all j
            pl.BlockSpec((tile_k, tile_n), lambda j, k: (k, j)),    # W^T streamed
            pl.BlockSpec((1, tile_n), lambda j, k: (0, j)),
            pl.BlockSpec((1, tile_n), lambda j, k: (0, j)),
        ],
        out_specs=pl.BlockSpec((B, tile_n), lambda j, k: (0, j)),
        scratch_shapes=[pltpu.VMEM((B, tile_n), jnp.float32)],
        compiler_params=pltpu.CompilerParams(
            # Dout tiles are independent -> "parallel" lets v7x's 2 TensorCores split
            # them; the Din reduction axis must stay "arbitrary".
            dimension_semantics=("parallel", "arbitrary"),
            vmem_limit_bytes=vmem_limit_bytes,
        ),
    )(scale, x_p, v_t, gamma_p, beta_p)
    return out_p[:, :dout]


def fcnet_forward_tiled(x, params, *, eps=1e-5, matmul_dtype=jnp.bfloat16):
    for (v, g, _, gamma, beta) in params:
        x = fc_layer_tiled(x, v, g, gamma, beta, eps=eps, matmul_dtype=matmul_dtype)
        # TODO(synk): dropout treated as identity (see fcnet_fused_kernel).
    return x


# ---------------------------------------------------------------------------
# Pure-JAX reference (module math, same bf16-matmul / f32-accumulate strategy).
# ---------------------------------------------------------------------------
def fcnet_reference(x, params, *, eps=1e-5, matmul_dtype=jnp.bfloat16):
    """Keeps the Linear bias to demonstrate that BN's mean subtraction cancels it
    (the kernels omit the bias)."""
    h = x
    for (v, g, b, gamma, beta) in params:
        s = g / jnp.sqrt(jnp.sum(v.astype(jnp.float32) ** 2))
        z = jnp.dot(h.astype(matmul_dtype), v.T.astype(matmul_dtype),
                    preferred_element_type=jnp.float32) * s + b.astype(jnp.float32)
        mean = jnp.mean(z, axis=0, keepdims=True)
        c = z - mean
        var = jnp.mean(c * c, axis=0, keepdims=True)
        y = c * jax.lax.rsqrt(var + eps) * gamma + beta
        h = jnp.maximum(y, 0.0)
    return h


def init_fcnet_params(key, layer_sizes):
    """Deterministic init mirroring the torch module's parameter shapes.

    Each layer: v (Dout, Din), g (scalar = ||v||_F, as at torch weight_norm(dim=None)
    init), bias (Dout,) (mathematically cancelled by the following BatchNorm),
    bn gamma (Dout,), bn beta (Dout,).
    """
    params = []
    for i in range(len(layer_sizes) - 1):
        din, dout = layer_sizes[i], layer_sizes[i + 1]
        key, kv, kb = jax.random.split(key, 3)
        bound = 1.0 / jnp.sqrt(din)
        v = jax.random.uniform(kv, (dout, din), jnp.float32, -bound, bound)
        g = jnp.sqrt(jnp.sum(v * v))
        b = jax.random.uniform(kb, (dout,), jnp.float32, -bound, bound)
        gamma = jnp.ones((dout,), jnp.float32)
        beta = jnp.zeros((dout,), jnp.float32)
        params.append((v, g, b, gamma, beta))
    return params


if __name__ == "__main__":
    layer_sizes = [16, 32, 8]   # FCNet([16, 32, 8], dropout=0.5)
    batch = 8

    key = jax.random.PRNGKey(0)
    key, kx = jax.random.split(key)
    x = jax.random.normal(kx, (batch, layer_sizes[0]), jnp.float32)
    params = init_fcnet_params(key, layer_sizes)

    # Primary path at these sizes: whole net fused into a single pallas_call.
    out_fused = jax.block_until_ready(fcnet_forward_fused(x, params))
    # Production-size path: per-layer tiled kernel (Dout x Din grid, megacore-parallel).
    out_tiled = jax.block_until_ready(fcnet_forward_tiled(x, params))
    ref = fcnet_reference(x, params)

    assert out_fused.shape == (batch, layer_sizes[-1]), out_fused.shape
    assert bool(jnp.all(jnp.isfinite(out_fused))), "non-finite output"
    assert bool(jnp.all(out_fused >= 0.0)), "ReLU output must be non-negative"
    assert bool(jnp.allclose(out_fused, out_tiled, atol=1e-3, rtol=1e-3)), (
        float(jnp.max(jnp.abs(out_fused - out_tiled))))
    assert bool(jnp.allclose(out_fused, ref, atol=2e-2, rtol=2e-2)), (
        float(jnp.max(jnp.abs(out_fused - ref))))
    print("KERNEL_OK")
</pallas_src>

<mosaic_0001>
module attributes {stable_mosaic.version = 11 : i64} {
  func.func @fcnet_fused_kernel(%arg0: i32, %arg1: memref<2xf32, #tpu.memory_space<smem>>, %arg2: memref<8x128xbf16, #tpu.memory_space<vmem>>, %arg3: memref<128x128xbf16, #tpu.memory_space<vmem>>, %arg4: memref<1x128xf32, #tpu.memory_space<vmem>>, %arg5: memref<1x128xf32, #tpu.memory_space<vmem>>, %arg6: memref<128x128xbf16, #tpu.memory_space<vmem>>, %arg7: memref<1x128xf32, #tpu.memory_space<vmem>>, %arg8: memref<1x128xf32, #tpu.memory_space<vmem>>, %arg9: memref<8x128xf32, #tpu.memory_space<vmem>>) attributes {dimension_semantics = [#tpu.dimension_semantics<arbitrary>], iteration_bounds = array<i64: 1>, scalar_prefetch = 0 : i64, scratch_operands = 0 : i64, tpu.core_type = #tpu.core_type<tc>, window_params = [{transform_indices = @transform_0, window_bounds = array<i64: 2>}, {pipeline_mode = #tpu.pipeline_mode<synchronous>, transform_indices = @transform_1, window_bounds = array<i64: 8, 128>}, {pipeline_mode = #tpu.pipeline_mode<synchronous>, transform_indices = @transform_2, window_bounds = array<i64: 128, 128>}, {pipeline_mode = #tpu.pipeline_mode<synchronous>, transform_indices = @transform_3, window_bounds = array<i64: 1, 128>}, {pipeline_mode = #tpu.pipeline_mode<synchronous>, transform_indices = @transform_4, window_bounds = array<i64: 1, 128>}, {pipeline_mode = #tpu.pipeline_mode<synchronous>, transform_indices = @transform_5, window_bounds = array<i64: 128, 128>}, {pipeline_mode = #tpu.pipeline_mode<synchronous>, transform_indices = @transform_6, window_bounds = array<i64: 1, 128>}, {pipeline_mode = #tpu.pipeline_mode<synchronous>, transform_indices = @transform_7, window_bounds = array<i64: 1, 128>}, {pipeline_mode = #tpu.pipeline_mode<synchronous>, transform_indices = @transform_8, window_bounds = array<i64: 8, 128>}]} {
    %c0 = arith.constant 0 : index
    %c0_0 = arith.constant 0 : index
    %0 = vector.load %arg2[%c0, %c0_0] : memref<8x128xbf16, #tpu.memory_space<vmem>>, vector<8x128xbf16>
    %c0_1 = arith.constant 0 : index
    %c0_2 = arith.constant 0 : index
    %1 = vector.load %arg3[%c0_1, %c0_2] : memref<128x128xbf16, #tpu.memory_space<vmem>>, vector<128x128xbf16>
    %c0_3 = arith.constant 0 : index
    %c0_4 = arith.constant 0 : index
    %2 = vector.load %arg4[%c0_3, %c0_4] : memref<1x128xf32, #tpu.memory_space<vmem>>, vector<1x128xf32>
    %c0_5 = arith.constant 0 : index
    %c0_6 = arith.constant 0 : index
    %3 = vector.load %arg5[%c0_5, %c0_6] : memref<1x128xf32, #tpu.memory_space<vmem>>, vector<1x128xf32>
    %c0_7 = arith.constant 0 : index
    %4 = memref.load %arg1[%c0_7] : memref<2xf32, #tpu.memory_space<smem>>
    %cst = arith.constant dense<0.000000e+00> : vector<8x128xf32>
    %5 = tpu.matmul %0, %1, %cst {dimension_numbers = #tpu.dot_dimension_numbers<[1], [0], [0], [1], [0, 0, 1, 1], [], []>} : vector<8x128xbf16>, vector<128x128xbf16>, vector<8x128xf32> -> vector<8x128xf32>
    %6 = vector.broadcast %4 : f32 to vector<8x128xf32>
    %7 = arith.mulf %5, %6 : vector<8x128xf32>
    %cst_8 = arith.constant dense<0.000000e+00> : vector<128xf32>
    %8 = vector.multi_reduction <add>, %7, %cst_8 [0] : vector<8x128xf32> to vector<128xf32>
    %9 = vector.shape_cast %8 : vector<128xf32> to vector<1x128xf32>
    %cst_9 = arith.constant 8.000000e+00 : f32
    %10 = vector.broadcast %cst_9 : f32 to vector<1x128xf32>
    %11 = arith.divf %9, %10 : vector<1x128xf32>
    %12 = vector.broadcast %11 : vector<1x128xf32> to vector<8x128xf32>
    %13 = arith.subf %7, %12 : vector<8x128xf32>
    %14 = arith.mulf %13, %13 : vector<8x128xf32>
    %cst_10 = arith.constant dense<0.000000e+00> : vector<128xf32>
    %15 = vector.multi_reduction <add>, %14, %cst_10 [0] : vector<8x128xf32> to vector<128xf32>
    %16 = vector.shape_cast %15 : vector<128xf32> to vector<1x128xf32>
    %cst_11 = arith.constant 8.000000e+00 : f32
    %17 = vector.broadcast %cst_11 : f32 to vector<1x128xf32>
    %18 = arith.divf %16, %17 : vector<1x128xf32>
    %cst_12 = arith.constant 9.99999974E-6 : f32
    %19 = vector.broadcast %cst_12 : f32 to vector<1x128xf32>
    %20 = arith.addf %18, %19 : vector<1x128xf32>
    %21 = math.rsqrt %20 : vector<1x128xf32>
    %22 = vector.broadcast %21 : vector<1x128xf32> to vector<8x128xf32>
    %23 = arith.mulf %13, %22 : vector<8x128xf32>
    %24 = vector.broadcast %2 : vector<1x128xf32> to vector<8x128xf32>
    %25 = arith.mulf %23, %24 : vector<8x128xf32>
    %26 = vector.broadcast %3 : vector<1x128xf32> to vector<8x128xf32>
    %27 = arith.addf %25, %26 : vector<8x128xf32>
    %cst_13 = arith.constant 0.000000e+00 : f32
    %28 = vector.broadcast %cst_13 : f32 to vector<8x128xf32>
    %29 = arith.maximumf %27, %28 : vector<8x128xf32>
    %30 = arith.truncf %29 : vector<8x128xf32> to vector<8x128xbf16>
    %c0_14 = arith.constant 0 : index
    %c0_15 = arith.constant 0 : index
    %31 = vector.load %arg6[%c0_14, %c0_15] : memref<128x128xbf16, #tpu.memory_space<vmem>>, vector<128x128xbf16>
    %c0_16 = arith.constant 0 : index
    %c0_17 = arith.constant 0 : index
    %32 = vector.load %arg7[%c0_16, %c0_17] : memref<1x128xf32, #tpu.memory_space<vmem>>, vector<1x128xf32>
    %c0_18 = arith.constant 0 : index
    %c0_19 = arith.constant 0 : index
    %33 = vector.load %arg8[%c0_18, %c0_19] : memref<1x128xf32, #tpu.memory_space<vmem>>, vector<1x128xf32>
    %c1 = arith.constant 1 : index
    %34 = memref.load %arg1[%c1] : memref<2xf32, #tpu.memory_space<smem>>
    %cst_20 = arith.constant dense<0.000000e+00> : vector<8x128xf32>
    %35 = tpu.matmul %30, %31, %cst_20 {dimension_numbers = #tpu.dot_dimension_numbers<[1], [0], [0], [1], [0, 0, 1, 1], [], []>} : vector<8x128xbf16>, vector<128x128xbf16>, vector<8x128xf32> -> vector<8x128xf32>
    %36 = vector.broadcast %34 : f32 to vector<8x128xf32>
    %37 = arith.mulf %35, %36 : vector<8x128xf32>
    %cst_21 = arith.constant dense<0.000000e+00> : vector<128xf32>
    %38 = vector.multi_reduction <add>, %37, %cst_21 [0] : vector<8x128xf32> to vector<128xf32>
    %39 = vector.shape_cast %38 : vector<128xf32> to vector<1x128xf32>
    %cst_22 = arith.constant 8.000000e+00 : f32
    %40 = vector.broadcast %cst_22 : f32 to vector<1x128xf32>
    %41 = arith.divf %39, %40 : vector<1x128xf32>
    %42 = vector.broadcast %41 : vector<1x128xf32> to vector<8x128xf32>
    %43 = arith.subf %37, %42 : vector<8x128xf32>
    %44 = arith.mulf %43, %43 : vector<8x128xf32>
    %cst_23 = arith.constant dense<0.000000e+00> : vector<128xf32>
    %45 = vector.multi_reduction <add>, %44, %cst_23 [0] : vector<8x128xf32> to vector<128xf32>
    %46 = vector.shape_cast %45 : vector<128xf32> to vector<1x128xf32>
    %cst_24 = arith.constant 8.000000e+00 : f32
    %47 = vector.broadcast %cst_24 : f32 to vector<1x128xf32>
    %48 = arith.divf %46, %47 : vector<1x128xf32>
    %cst_25 = arith.constant 9.99999974E-6 : f32
    %49 = vector.broadcast %cst_25 : f32 to vector<1x128xf32>
    %50 = arith.addf %48, %49 : vector<1x128xf32>
    %51 = math.rsqrt %50 : vector<1x128xf32>
    %52 = vector.broadcast %51 : vector<1x128xf32> to vector<8x128xf32>
    %53 = arith.mulf %43, %52 : vector<8x128xf32>
    %54 = vector.broadcast %32 : vector<1x128xf32> to vector<8x128xf32>
    %55 = arith.mulf %53, %54 : vector<8x128xf32>
    %56 = vector.broadcast %33 : vector<1x128xf32> to vector<8x128xf32>
    %57 = arith.addf %55, %56 : vector<8x128xf32>
    %cst_26 = arith.constant 0.000000e+00 : f32
    %58 = vector.broadcast %cst_26 : f32 to vector<8x128xf32>
    %59 = arith.maximumf %57, %58 : vector<8x128xf32>
    %c0_27 = arith.constant 0 : index
    %c0_28 = arith.constant 0 : index
    %60 = vector.load %arg9[%c0_27, %c0_28] : memref<8x128xf32, #tpu.memory_space<vmem>>, vector<8x128xf32>
    tpu.vector_store %arg9[%c0_27, %c0_28], %59 {strides = array<i32>} : memref<8x128xf32, #tpu.memory_space<vmem>>, vector<8x128xf32>,
    return
  }
  func.func @transform_0(%arg0: i32) -> i32 {
    %c0_i32 = arith.constant 0 : i32
    %c0_i32_0 = arith.constant 0 : i32
    return %c0_i32 : i32
  }
  func.func @transform_1(%arg0: i32) -> (i32, i32) {
    %c0_i32 = arith.constant 0 : i32
    %c0_i32_0 = arith.constant 0 : i32
    %c0_i32_1 = arith.constant 0 : i32
    return %c0_i32, %c0_i32_0 : i32, i32
  }
  func.func @transform_2(%arg0: i32) -> (i32, i32) {
    %c0_i32 = arith.constant 0 : i32
    %c0_i32_0 = arith.constant 0 : i32
    %c0_i32_1 = arith.constant 0 : i32
    return %c0_i32, %c0_i32_0 : i32, i32
  }
  func.func @transform_3(%arg0: i32) -> (i32, i32) {
    %c0_i32 = arith.constant 0 : i32
    %c0_i32_0 = arith.constant 0 : i32
    %c0_i32_1 = arith.constant 0 : i32
    return %c0_i32, %c0_i32_0 : i32, i32
  }
  func.func @transform_4(%arg0: i32) -> (i32, i32) {
    %c0_i32 = arith.constant 0 : i32
    %c0_i32_0 = arith.constant 0 : i32
    %c0_i32_1 = arith.constant 0 : i32
    return %c0_i32, %c0_i32_0 : i32, i32
  }
  func.func @transform_5(%arg0: i32) -> (i32, i32) {
    %c0_i32 = arith.constant 0 : i32
    %c0_i32_0 = arith.constant 0 : i32
    %c0_i32_1 = arith.constant 0 : i32
    return %c0_i32, %c0_i32_0 : i32, i32
  }
  func.func @transform_6(%arg0: i32) -> (i32, i32) {
    %c0_i32 = arith.constant 0 : i32
    %c0_i32_0 = arith.constant 0 : i32
    %c0_i32_1 = arith.constant 0 : i32
    return %c0_i32, %c0_i32_0 : i32, i32
  }
  func.func @transform_7(%arg0: i32) -> (i32, i32) {
    %c0_i32 = arith.constant 0 : i32
    %c0_i32_0 = arith.constant 0 : i32
    %c0_i32_1 = arith.constant 0 : i32
    return %c0_i32, %c0_i32_0 : i32, i32
  }
  func.func @transform_8(%arg0: i32) -> (i32, i32) {
    %c0_i32 = arith.constant 0 : i32
    %c0_i32_0 = arith.constant 0 : i32
    %c0_i32_1 = arith.constant 0 : i32
    return %c0_i32, %c0_i32_0 : i32, i32
  }
}

</mosaic_0001>

<llo_original>
// kernel: tpu_custom_call.1
$region0: #{tpu_custom_call.1}
  #allocation0 [shape = 'u32[]', space=smem, size = 0x4, offset = 0x4, fixed_abs, tag = 'smem constant byte address 0x4 - core index']
  #allocation1 [shape = 'u32[144,128]{1,0:T(1,128)}', space=vmem, size = 0x12000, scoped, tag = 'internal scratch']
  %s0 = inlined_call_operand.hbm [shape: f32[2], index: 0, kind: input, shape index: {}]
  %s1 = inlined_call_operand.hbm [shape: bf16[8,128], index: 1, kind: input, shape index: {}]
  %s2 = inlined_call_operand.hbm [shape: bf16[128,128], index: 2, kind: input, shape index: {}]
  %s3 = inlined_call_operand.vmem [shape: f32[1,128], index: 3, kind: input, shape index: {}]
  %s4 = inlined_call_operand.vmem [shape: f32[1,128], index: 4, kind: input, shape index: {}]
  %s5 = inlined_call_operand.hbm [shape: bf16[128,128], index: 5, kind: input, shape index: {}]
  %s6 = inlined_call_operand.vmem [shape: f32[1,128], index: 6, kind: input, shape index: {}]
  %s7 = inlined_call_operand.vmem [shape: f32[1,128], index: 7, kind: input, shape index: {}]
  %s8 = inlined_call_operand.hbm [shape: f32[8,128], index: 8, kind: output, shape index: {}]
  %s9 = sld [smem:[#allocation0]]
  $region58: #{tpu_custom_call.1} parent=0
    _
  %s11 = ssub.s32 1, %s9
  %s12 = scalar_select 0, %s11, %s9
  $region1: #{tpu_custom_call.1} parent=0
    #allocation2 [shape = 'u8[512]{0}', space=smem, size = 0x200, scoped, tag = 'input window, operand 0, single buffered']
    #allocation3 [shape = 's32[1]{0}', space=sflag, size = 0x4, scoped, tag = 'scoped memory for tpu_custom_call.1']
    #allocation4 [shape = 's32[1]{0}', space=sflag, size = 0x4, scoped, tag = 'scoped memory for tpu_custom_call.1']
    #allocation5 [shape = 's32[1]{0}', space=sflag, size = 0x4, scoped, tag = 'scoped memory for tpu_custom_call.1']
    #allocation6 [shape = 'u8[2048]{0}', space=vmem, size = 0x800, scoped, tag = 'input window, operand 1, single buffered']
    #allocation7 [shape = 'u8[32768]{0}', space=vmem, size = 0x8000, scoped, tag = 'input window, operand 2, single buffered']
    #allocation8 [shape = 's32[1]{0}', space=sflag, size = 0x4, scoped, tag = 'scoped memory for tpu_custom_call.1']
    #allocation9 [shape = 'u8[32768]{0}', space=vmem, size = 0x8000, scoped, tag = 'input window, operand 5, single buffered']
    #allocation10 [shape = 'u8[4096]{0}', space=vmem, size = 0x1000, scoped, tag = 'output window, operand 0, single buffered']
    %13 = vsyncpa [#allocation5], 0
    %14 = vsyncpa [#allocation3], 0
    %15 = vsyncpa [#allocation8], 0
    %16 = vsyncpa [#allocation4], 0
    // Predicated region
    $region2: #{tpu_custom_call.1} parent=1 // pred_check
      _
    $region3: #{tpu_custom_call.1} parent=1 // pred_check_branch
      %18 = sbr.rel (0) target = $region5
    $region4: #{tpu_custom_call.1} parent=1 // pred_region
      %s20 = ssub.s32 16, 16
      %21 = vsyncadd [#allocation5], %s20
      %24 = dma.hbm_to_smem %s0, 16, [#allocation2], [#allocation5]
    $region5: #{tpu_custom_call.1} parent=1 // pred_fallthru
      _
    // Predicated region
    $region6: #{tpu_custom_call.1} parent=1 // pred_check
      _
    $region7: #{tpu_custom_call.1} parent=1 // pred_check_branch
      %26 = sbr.rel (0) target = $region9
    $region8: #{tpu_custom_call.1} parent=1 // pred_region
      %s28 = ssub.s32 64, 64
      %29 = vsyncadd [#allocation3], %s28
      %s31 = sshll.u32 [#allocation6], 4
      %s32 = int_to_ptr.vmem [resolvable:$true] %s31
      %34 = dma.hbm_to_vmem [thread:$0]  %s1, 64, %s32, [#allocation3]
    $region9: #{tpu_custom_call.1} parent=1 // pred_fallthru
      _
    // Predicated region
    $region10: #{tpu_custom_call.1} parent=1 // pred_check
      _
    $region11: #{tpu_custom_call.1} parent=1 // pred_check_branch
      %36 = sbr.rel (0) target = $region13
    $region12: #{tpu_custom_call.1} parent=1 // pred_region
      %s38 = ssub.s32 1024, 1024
      %39 = vsyncadd [#allocation8], %s38
      %s40 = sshll.u32 [#allocation7], 4
      %s41 = int_to_ptr.vmem [resolvable:$true] %s40
      %46 = dma.hbm_to_vmem [thread:$0]  %s2, 1024, %s41, [#allocation8], 64, 64, 4
    $region13: #{tpu_custom_call.1} parent=1 // pred_fallthru
      _
    // Predicated region
    $region14: #{tpu_custom_call.1} parent=1 // pred_check
      _
    $region15: #{tpu_custom_call.1} parent=1 // pred_check_branch
      %48 = sbr.rel (0) target = $region17
    $region16: #{tpu_custom_call.1} parent=1 // pred_region
      _
    $region17: #{tpu_custom_call.1} parent=1 // pred_fallthru
      _
    // Predicated region
    $region18: #{tpu_custom_call.1} parent=1 // pred_check
      _
    $region19: #{tpu_custom_call.1} parent=1 // pred_check_branch
      %50 = sbr.rel (0) target = $region21
    $region20: #{tpu_custom_call.1} parent=1 // pred_region
      _
    $region21: #{tpu_custom_call.1} parent=1 // pred_fallthru
      _
    // Predicated region
    $region22: #{tpu_custom_call.1} parent=1 // pred_check
      _
    $region23: #{tpu_custom_call.1} parent=1 // pred_check_branch
      %52 = sbr.rel (0) target = $region25
    $region24: #{tpu_custom_call.1} parent=1 // pred_region
      %s54 = ssub.s32 1024, 1024
      %55 = vsyncadd [#allocation8], %s54
      %s56 = sshll.u32 [#allocation9], 4
      %s57 = int_to_ptr.vmem [resolvable:$true] %s56
      %62 = dma.hbm_to_vmem [thread:$0]  %s5, 1024, %s57, [#allocation8], 64, 64, 4
    $region25: #{tpu_custom_call.1} parent=1 // pred_fallthru
      _
    // Predicated region
    $region26: #{tpu_custom_call.1} parent=1 // pred_check
      _
    $region27: #{tpu_custom_call.1} parent=1 // pred_check_branch
      %64 = sbr.rel (0) target = $region29
    $region28: #{tpu_custom_call.1} parent=1 // pred_region
      _
    $region29: #{tpu_custom_call.1} parent=1 // pred_fallthru
      _
    // Predicated region
    $region30: #{tpu_custom_call.1} parent=1 // pred_check
      _
    $region31: #{tpu_custom_call.1} parent=1 // pred_check_branch
      %66 = sbr.rel (0) target = $region33
    $region32: #{tpu_custom_call.1} parent=1 // pred_region
      _
    $region33: #{tpu_custom_call.1} parent=1 // pred_fallthru
      _
    // Predicated region
    $region34: #{tpu_custom_call.1} parent=1 // pred_check
      _
    $region35: #{tpu_custom_call.1} parent=1 // pred_check_branch
      %68 = sbr.rel (0) target = $region37
    $region36: #{tpu_custom_call.1} parent=1 // pred_region
      %69 = dma.done [#allocation5], 16
    $region37: #{tpu_custom_call.1} parent=1 // pred_fallthru
      _
    // Predicated region
    $region38: #{tpu_custom_call.1} parent=1 // pred_check
      _
    $region39: #{tpu_custom_call.1} parent=1 // pred_check_branch
      %71 = sbr.rel (0) target = $region41
    $region40: #{tpu_custom_call.1} parent=1 // pred_region
      %72 = dma.done [#allocation3], 64
    $region41: #{tpu_custom_call.1} parent=1 // pred_fallthru
      _
    // Predicated region
    $region42: #{tpu_custom_call.1} parent=1 // pred_check
      _
    $region43: #{tpu_custom_call.1} parent=1 // pred_check_branch
      %74 = sbr.rel (0) target = $region45
    $region44: #{tpu_custom_call.1} parent=1 // pred_region
      %75 = dma.done [#allocation8], 1024
    $region45: #{tpu_custom_call.1} parent=1 // pred_fallthru
      _
    // Predicated region
    $region46: #{tpu_custom_call.1} parent=1 // pred_check
      _
    $region47: #{tpu_custom_call.1} parent=1 // pred_check_branch
      %77 = sbr.rel (0) target = $region49
    $region48: #{tpu_custom_call.1} parent=1 // pred_region
      %78 = dma.done [#allocation8], 1024
    $region49: #{tpu_custom_call.1} parent=1 // pred_fallthru
      _
    %79 = sfence
    %v81 = vld [vmem:[#allocation6] sm:$0xf]
    %v82 = vld [vmem:[#allocation7] sm:$0xf]
    %v83 = vld [vmem:[#allocation7 + $0x4] sm:$0xf]
    %v84 = vld [vmem:[#allocation7 + $0x8] sm:$0xf]
    %v85 = vld [vmem:[#allocation7 + $0xc] sm:$0xf]
    %v86 = vld [vmem:[#allocation7 + $0x10] sm:$0xf]
    %v87 = vld [vmem:[#allocation7 + $0x14] sm:$0xf]
    %v88 = vld [vmem:[#allocation7 + $0x18] sm:$0xf]
    %v89 = vld [vmem:[#allocation7 + $0x1c] sm:$0xf]
    %v90 = vld [vmem:[#allocation7 + $0x20] sm:$0xf]
    %v91 = vld [vmem:[#allocation7 + $0x24] sm:$0xf]
    %v92 = vld [vmem:[#allocation7 + $0x28] sm:$0xf]
    %v93 = vld [vmem:[#allocation7 + $0x2c] sm:$0xf]
    %v94 = vld [vmem:[#allocation7 + $0x30] sm:$0xf]
    %v95 = vld [vmem:[#allocation7 + $0x34] sm:$0xf]
    %v96 = vld [vmem:[#allocation7 + $0x38] sm:$0xf]
    %v97 = vld [vmem:[#allocation7 + $0x3c] sm:$0xf]
    %v98 = vld [vmem:[%s3] sm:$0x1]
    %v99 = vld [vmem:[%s4] sm:$0x1]
    %s100 = sld [smem:[#allocation2]]
    %v117 = vunpack.c.l.b16 %v82
    %v118 = vunpack.c.l.b16 %v83
    %v119 = vunpack.c.l.b16 %v84
    %v120 = vunpack.c.l.b16 %v85
    %v121 = vunpack.c.l.b16 %v86
    %v122 = vunpack.c.l.b16 %v87
    %v123 = vunpack.c.l.b16 %v88
    %v124 = vunpack.c.l.b16 %v89
    %v125 = vunpack.c.l.b16 %v90
    %v126 = vunpack.c.l.b16 %v91
    %v127 = vunpack.c.l.b16 %v92
    %v128 = vunpack.c.l.b16 %v93
    %v129 = vunpack.c.l.b16 %v94
    %v130 = vunpack.c.l.b16 %v95
    %v131 = vunpack.c.l.b16 %v96
    %v132 = vunpack.c.l.b16 %v97
    %v133 = vpack.c.b16 %v118, %v117
    %v134 = vpack.c.b16 %v120, %v119
    %v135 = vpack.c.b16 %v122, %v121
    %v136 = vpack.c.b16 %v124, %v123
    %v137 = vpack.c.b16 %v126, %v125
    %v138 = vpack.c.b16 %v128, %v127
    %v139 = vpack.c.b16 %v130, %v129
    %v140 = vpack.c.b16 %v132, %v131
    %149 = vmatprep.subr.bf16.mxu0 0
    %150 = vmatpush1.bf16.msra.mxu0 %v133
    %151 = vmatprep.subr.bf16.mxu0 0
    %152 = vmatpush1.bf16.msra.mxu0 %v134
    %153 = vmatprep.subr.bf16.mxu0 0
    %154 = vmatpush1.bf16.msra.mxu0 %v135
    %155 = vmatprep.subr.bf16.mxu0 0
    %156 = vmatpush1.bf16.msra.mxu0 %v136
    %157 = vmatprep.subr.bf16.mxu0 0
    %158 = vmatpush1.bf16.msra.mxu0 %v137
    %159 = vmatprep.subr.bf16.mxu0 0
    %160 = vmatpush1.bf16.msra.mxu0 %v138
    %161 = vmatprep.subr.bf16.mxu0 0
    %162 = vmatpush1.bf16.msra.mxu0 %v139
    %163 = vmatprep.subr.bf16.mxu0 0
    %164 = vmatpush1.bf16.msra.mxu0 %v140
    %165 = vmatprep.subr.bf16.mxu0 0
    %166 = vmatpush1.bf16.msra.mxu0 0
    %167 = vmatprep.subr.bf16.mxu0 0
    %168 = vmatpush1.bf16.msra.mxu0 0
    %169 = vmatprep.subr.bf16.mxu0 0
    %170 = vmatpush1.bf16.msra.mxu0 0
    %171 = vmatprep.subr.bf16.mxu0 0
    %172 = vmatpush1.bf16.msra.mxu0 0
    %173 = vmatprep.subr.bf16.mxu0 0
    %174 = vmatpush1.bf16.msra.mxu0 0
    %175 = vmatprep.subr.bf16.mxu0 0
    %176 = vmatpush1.bf16.msra.mxu0 0
    %177 = vmatprep.subr.bf16.mxu0 0
    %178 = vmatpush1.bf16.msra.mxu0 0
    %179 = vmatprep.subr.bf16.mxu0 0
    %180 = vmatpush1.bf16.msra.mxu0 0
    %181 = vmatprep.mubr.bf16.mxu0 0
    %182 = vmatmul.mubr.bf16.gmra.mrb[0].mxu0 %v81
    %v183 = vpop.f32.mrb[0].mxu0
    %v184 = vadd.f32 0.0, %v183
    %v185 = vpop.f32.mrb[0].mxu0
    %v186 = vpop.f32.mrb[0].mxu0
    %v187 = vpop.f32.mrb[0].mxu0
    %188 = vdwg.mxu0
    %v189 = vstv %s100
    %v190 = vmul.f32 %v184, %v189
    %v191 = vrot.slane %v190, 4
    %v192 = vadd.f32 %v190, %v191
    %v193 = vrot.slane %v192, 2
    %v194 = vadd.f32 %v192, %v193
    %v195 = vrot.slane %v194, 1
    %v196 = vadd.f32 %v194, %v195
    %v197 = vrcp.pop 8.0
    %v198 = vmul.f32 %v196, %v197
    %v199 = vsub.f32 %v190, %v198
    %v200 = vmul.f32 %v199, %v199
    %v201 = vrot.slane %v200, 4
    %v202 = vadd.f32 %v200, %v201
    %v203 = vrot.slane %v202, 2
    %v204 = vadd.f32 %v202, %v203
    %v205 = vrot.slane %v204, 1
    %v206 = vadd.f32 %v204, %v205
    %v207 = vmul.f32 %v206, %v197
    %v208 = vadd.f32 %v207, 1e-05
    %v209 = vrsqrt.pop %v208
    %v210 = vmul.f32 %v199, %v209
    %v212 = vlaneseq
    %v213 = vshrl.u32 %v212, 7
    %v214 = vsub.s32 0, %v213
    %v215 = vrot.slane %v98, %v214
    %v217 = vmul.f32 %v210, %v215
    %v219 = vlaneseq
    %v220 = vshrl.u32 %v219, 7
    %v221 = vsub.s32 0, %v220
    %v222 = vrot.slane %v99, %v221
    %v224 = vadd.f32 %v217, %v222
    %v225 = vmax.f32 %v224, 0.0
    %v226 = vpack.c.bf16 %v225, %v225
    %v227 = vld [vmem:[#allocation9] sm:$0xf]
    %v228 = vld [vmem:[#allocation9 + $0x4] sm:$0xf]
    %v229 = vld [vmem:[#allocation9 + $0x8] sm:$0xf]
    %v230 = vld [vmem:[#allocation9 + $0xc] sm:$0xf]
    %v231 = vld [vmem:[#allocation9 + $0x10] sm:$0xf]
    %v232 = vld [vmem:[#allocation9 + $0x14] sm:$0xf]
    %v233 = vld [vmem:[#allocation9 + $0x18] sm:$0xf]
    %v234 = vld [vmem:[#allocation9 + $0x1c] sm:$0xf]
    %v235 = vld [vmem:[#allocation9 + $0x20] sm:$0xf]
    %v236 = vld [vmem:[#allocation9 + $0x24] sm:$0xf]
    %v237 = vld [vmem:[#allocation9 + $0x28] sm:$0xf]
    %v238 = vld [vmem:[#allocation9 + $0x2c] sm:$0xf]
    %v239 = vld [vmem:[#allocation9 + $0x30] sm:$0xf]
    %v240 = vld [vmem:[#allocation9 + $0x34] sm:$0xf]
    %v241 = vld [vmem:[#allocation9 + $0x38] sm:$0xf]
    %v242 = vld [vmem:[#allocation9 + $0x3c] sm:$0xf]
    %v243 = vld [vmem:[%s6] sm:$0x1]
    %v244 = vld [vmem:[%s7] sm:$0x1]
    %s245 = sld [smem:[#allocation2 + $0x1]]
    %v262 = vunpack.c.l.b16 %v227
    %v263 = vunpack.c.l.b16 %v228
    %v264 = vunpack.c.l.b16 %v229
    %v265 = vunpack.c.l.b16 %v230
    %v266 = vunpack.c.l.b16 %v231
    %v267 = vunpack.c.l.b16 %v232
    %v268 = vunpack.c.l.b16 %v233
    %v269 = vunpack.c.l.b16 %v234
    %v270 = vunpack.c.l.b16 %v235
    %v271 = vunpack.c.l.b16 %v236
    %v272 = vunpack.c.l.b16 %v237
    %v273 = vunpack.c.l.b16 %v238
    %v274 = vunpack.c.l.b16 %v239
    %v275 = vunpack.c.l.b16 %v240
    %v276 = vunpack.c.l.b16 %v241
    %v277 = vunpack.c.l.b16 %v242
    %v278 = vpack.c.b16 %v263, %v262
    %v279 = vpack.c.b16 %v265, %v264
    %v280 = vpack.c.b16 %v267, %v266
    %v281 = vpack.c.b16 %v269, %v268
    %v282 = vpack.c.b16 %v271, %v270
    %v283 = vpack.c.b16 %v273, %v272
    %v284 = vpack.c.b16 %v275, %v274
    %v285 = vpack.c.b16 %v277, %v276
    %294 = vmatprep.subr.bf16.mxu0 0
    %295 = vmatpush1.bf16.msra.mxu0 %v278
    %296 = vmatprep.subr.bf16.mxu0 0
    %297 = vmatpush1.bf16.msra.mxu0 %v279
    %298 = vmatprep.subr.bf16.mxu0 0
    %299 = vmatpush1.bf16.msra.mxu0 %v280
    %300 = vmatprep.subr.bf16.mxu0 0
    %301 = vmatpush1.bf16.msra.mxu0 %v281
    %302 = vmatprep.subr.bf16.mxu0 0
    %303 = vmatpush1.bf16.msra.mxu0 %v282
    %304 = vmatprep.subr.bf16.mxu0 0
    %305 = vmatpush1.bf16.msra.mxu0 %v283
    %306 = vmatprep.subr.bf16.mxu0 0
    %307 = vmatpush1.bf16.msra.mxu0 %v284
    %308 = vmatprep.subr.bf16.mxu0 0
    %309 = vmatpush1.bf16.msra.mxu0 %v285
    %310 = vmatprep.subr.bf16.mxu0 0
    %311 = vmatpush1.bf16.msra.mxu0 0
    %312 = vmatprep.subr.bf16.mxu0 0
    %313 = vmatpush1.bf16.msra.mxu0 0
    %314 = vmatprep.subr.bf16.mxu0 0
    %315 = vmatpush1.bf16.msra.mxu0 0
    %316 = vmatprep.subr.bf16.mxu0 0
    %317 = vmatpush1.bf16.msra.mxu0 0
    %318 = vmatprep.subr.bf16.mxu0 0
    %319 = vmatpush1.bf16.msra.mxu0 0
    %320 = vmatprep.subr.bf16.mxu0 0
    %321 = vmatpush1.bf16.msra.mxu0 0
    %322 = vmatprep.subr.bf16.mxu0 0
    %323 = vmatpush1.bf16.msra.mxu0 0
    %324 = vmatprep.subr.bf16.mxu0 0
    %325 = vmatpush1.bf16.msra.mxu0 0
    %326 = vmatprep.mubr.bf16.mxu0 0
    %327 = vmatmul.mubr.bf16.gmra.mrb[0].mxu0 %v226
    %v328 = vpop.f32.mrb[0].mxu0
    %v329 = vadd.f32 0.0, %v328
    %v330 = vpop.f32.mrb[0].mxu0
    %v331 = vpop.f32.mrb[0].mxu0
    %v332 = vpop.f32.mrb[0].mxu0
    %333 = vdwg.mxu0
    %v334 = vstv %s245
    %v335 = vmul.f32 %v329, %v334
    %v336 = vrot.slane %v335, 4
    %v337 = vadd.f32 %v335, %v336
    %v338 = vrot.slane %v337, 2
    %v339 = vadd.f32 %v337, %v338
    %v340 = vrot.slane %v339, 1
    %v341 = vadd.f32 %v339, %v340
    %v342 = vmul.f32 %v341, %v197
    %v343 = vsub.f32 %v335, %v342
    %v344 = vmul.f32 %v343, %v343
    %v345 = vrot.slane %v344, 4
    %v346 = vadd.f32 %v344, %v345
    %v347 = vrot.slane %v346, 2
    %v348 = vadd.f32 %v346, %v347
    %v349 = vrot.slane %v348, 1
    %v350 = vadd.f32 %v348, %v349
    %v351 = vmul.f32 %v350, %v197
    %v352 = vadd.f32 %v351, 1e-05
    %v353 = vrsqrt.pop %v352
    %v354 = vmul.f32 %v343, %v353
    %v356 = vlaneseq
    %v357 = vshrl.u32 %v356, 7
    %v358 = vsub.s32 0, %v357
    %v359 = vrot.slane %v243, %v358
    %v361 = vmul.f32 %v354, %v359
    %v363 = vlaneseq
    %v364 = vshrl.u32 %v363, 7
    %v365 = vsub.s32 0, %v364
    %v366 = vrot.slane %v244, %v365
    %v368 = vadd.f32 %v361, %v366
    %v369 = vmax.f32 %v368, 0.0
    %370 = vst [vmem:[#allocation10] sm:$0xff] %v369
    // Predicated region
    $region50: #{tpu_custom_call.1} parent=1 // pred_check
      _
    $region51: #{tpu_custom_call.1} parent=1 // pred_check_branch
      %372 = sbr.rel (0) target = $region53
    $region52: #{tpu_custom_call.1} parent=1 // pred_region
      %s374 = ssub.s32 128, 128
      %375 = vsyncadd [#allocation4], %s374
      %s377 = sshll.u32 [#allocation10], 4
      %s378 = int_to_ptr.vmem [resolvable:$true] %s377
      %380 = dma.vmem_to_hbm [thread:$0]  %s378, 128, %s8, [#allocation4]
    $region53: #{tpu_custom_call.1} parent=1 // pred_fallthru
      _
    // Predicated region
    $region54: #{tpu_custom_call.1} parent=1 // pred_check
      _
    $region55: #{tpu_custom_call.1} parent=1 // pred_check_branch
      %382 = sbr.rel (0) target = $region57
    $region56: #{tpu_custom_call.1} parent=1 // pred_region
      %383 = dma.done [#allocation4], 128
    $region57: #{tpu_custom_call.1} parent=1 // pred_fallthru
      _
    %384 = vsyncpa [#allocation3], 1
    %385 = vsyncpa [#allocation8], 1
    %386 = vsyncpa [#allocation4], 1
    %387 = vsyncpa [#allocation5], 1

</llo_original>
